<compile_context>
chip_gen: v6e
topology: v6e:2x2x1
jax: 0.10.0
libtpu: 0.0.40
codegen_flags: <defaults>
</compile_context>

<pallas_src>
import functools

import jax
import jax.numpy as jnp
from jax.experimental import pallas as pl
from jax.experimental.pallas import tpu as pltpu


def _round_up(x, m):
    return ((x + m - 1) // m) * m


def _maybe_pad2d(a, pad_rows, pad_cols):
    if pad_rows == 0 and pad_cols == 0:
        return a
    return jnp.pad(a, ((0, pad_rows), (0, pad_cols)))


def _ffn_kernel(x_ref, w1_ref, b1_ref, w2_ref, b2_ref, o_ref, acc_ref):
    """One (row-tile, d_ff-tile) step of the fused FFN.

    x_ref  : (TM, d_model)   bf16 token rows          (constant over k)
    w1_ref : (d_model, TF)   bf16 first-layer weight, k-th d_ff chunk
    b1_ref : (1, TF)         f32 first-layer bias,    k-th d_ff chunk
    w2_ref : (TF, d_model)   bf16 second-layer weight, k-th d_ff chunk
    b2_ref : (1, d_model)    f32 second-layer bias    (constant)
    o_ref  : (TM, d_model)   output rows              (constant over k)
    acc_ref: (TM, d_model)   f32 accumulator scratch
    """
    k = pl.program_id(1)

    @pl.when(k == 0)
    def _init():
        acc_ref[...] = jnp.zeros_like(acc_ref)

    # First matmul (bf16 in, f32 acc) + bias + ReLU for this d_ff chunk.
    h = jnp.dot(x_ref[...], w1_ref[...], preferred_element_type=jnp.float32)
    h = jnp.maximum(h + b1_ref[...], 0.0)
    # Dropout after ReLU is identity in eval mode.

    # Second matmul: accumulate this chunk's contribution to the output rows.
    acc_ref[...] += jnp.dot(h.astype(w2_ref.dtype), w2_ref[...],
                            preferred_element_type=jnp.float32)

    @pl.when(k == pl.num_programs(1) - 1)
    def _finalize():
        o_ref[...] = (acc_ref[...] + b2_ref[...]).astype(o_ref.dtype)


def positionwise_feed_forward(x, w1, b1, w2, b2, *, tile_m=256, tile_ff=512):
    """x: (B, S, d_model) -> (B, S, d_model).  Eval-mode FFN forward pass."""
    B, S, d_model = x.shape
    d_ff = w1.shape[1]
    assert tile_m % 8 == 0 and tile_ff % 128 == 0
    assert w1.shape == (d_model, d_ff)
    assert w2.shape == (d_ff, d_model)

    n_rows = B * S

    # Effective tiles: never larger than the (padded) problem itself.
    tm = min(tile_m, _round_up(n_rows, 8))
    tf = min(tile_ff, _round_up(d_ff, 128))
    m_pad = _round_up(n_rows, tm)
    ff_pad = _round_up(d_ff, tf)

    # bf16 MXU inputs; biases stay f32 (added to the f32 accumulators).
    x2d = x.reshape(n_rows, d_model)
    x2d = _maybe_pad2d(x2d, m_pad - n_rows, 0).astype(jnp.bfloat16)
    w1p = _maybe_pad2d(w1, 0, ff_pad - d_ff).astype(jnp.bfloat16)
    b1p = _maybe_pad2d(b1.reshape(1, d_ff), 0, ff_pad - d_ff).astype(jnp.float32)
    w2p = _maybe_pad2d(w2, ff_pad - d_ff, 0).astype(jnp.bfloat16)
    b2p = b2.reshape(1, d_model).astype(jnp.float32)

    grid = (m_pad // tm, ff_pad // tf)

    flops = 4 * m_pad * d_model * ff_pad  # two matmuls, 2*M*K*N each
    bytes_accessed = (
        (x2d.size + w1p.size + w2p.size) * 2       # bf16 inputs
        + (b1p.size + b2p.size) * 4                 # f32 biases
        + m_pad * d_model * x.dtype.itemsize        # output
    )

    out2d = pl.pallas_call(
        _ffn_kernel,
        out_shape=jax.ShapeDtypeStruct((m_pad, d_model), x.dtype),
        grid_spec=pltpu.PrefetchScalarGridSpec(
            num_scalar_prefetch=0,
            grid=grid,
            in_specs=[
                pl.BlockSpec((tm, d_model), lambda i, k: (i, 0)),    # x rows
                pl.BlockSpec((d_model, tf), lambda i, k: (0, k)),    # w1 chunk
                pl.BlockSpec((1, tf),       lambda i, k: (0, k)),    # b1 chunk
                pl.BlockSpec((tf, d_model), lambda i, k: (k, 0)),    # w2 chunk
                pl.BlockSpec((1, d_model),  lambda i, k: (0, 0)),    # b2
            ],
            out_specs=pl.BlockSpec((tm, d_model), lambda i, k: (i, 0)),
            scratch_shapes=[pltpu.VMEM((tm, d_model), jnp.float32)],
        ),
        compiler_params=pltpu.CompilerParams(
            dimension_semantics=("parallel", "arbitrary"),
            vmem_limit_bytes=64 * 1024 * 1024,
        ),
        cost_estimate=pl.CostEstimate(
            flops=flops, transcendentals=0, bytes_accessed=bytes_accessed),
    )(x2d, w1p, b1p, w2p, b2p)

    return out2d[:n_rows].reshape(B, S, d_model)


def init_params(key, d_model, d_ff, dtype=jnp.float32):
    """Deterministic PyTorch-nn.Linear-style init (uniform +-1/sqrt(fan_in))."""
    k1, k2, k3, k4 = jax.random.split(key, 4)
    bound1 = 1.0 / jnp.sqrt(d_model)
    bound2 = 1.0 / jnp.sqrt(d_ff)
    # PyTorch stores Linear weight as (out, in); we keep (in, out) for x @ W.
    w1 = jax.random.uniform(k1, (d_model, d_ff), dtype, -bound1, bound1)
    b1 = jax.random.uniform(k2, (d_ff,), dtype, -bound1, bound1)
    w2 = jax.random.uniform(k3, (d_ff, d_model), dtype, -bound2, bound2)
    b2 = jax.random.uniform(k4, (d_model,), dtype, -bound2, bound2)
    return w1, b1, w2, b2


def reference_ffn(x, w1, b1, w2, b2):
    h = jnp.maximum(jnp.einsum("bsd,df->bsf", x, w1) + b1, 0.0)
    return jnp.einsum("bsf,fd->bsd", h, w2) + b2


if __name__ == "__main__":
    key = jax.random.PRNGKey(0)
    ffn = jax.jit(functools.partial(positionwise_feed_forward,
                                    tile_m=256, tile_ff=512))

    # Two small configs: one aligned, one that exercises row/d_ff padding.
    configs = [
        (2, 16, 128, 256),   # lane-dense, evenly divisible
        (2, 10, 128, 200),   # ragged rows and ragged d_ff (padding path)
    ]
    for batch, seq_len, d_model, d_ff in configs:
        kx, kp, key = jax.random.split(key, 3)
        x = jax.random.normal(kx, (batch, seq_len, d_model), dtype=jnp.float32)
        w1, b1, w2, b2 = init_params(kp, d_model, d_ff)

        out = jax.block_until_ready(ffn(x, w1, b1, w2, b2))
        ref = reference_ffn(x, w1, b1, w2, b2)

        assert out.shape == (batch, seq_len, d_model)
        # bf16 MXU inputs vs f32 reference -> relaxed tolerance.
        assert jnp.allclose(out, ref, atol=5e-2, rtol=5e-2), "mismatch vs reference"

    print("KERNEL_OK")
</pallas_src>

<mosaic_0001>
module attributes {stable_mosaic.version = 11 : i64} {
  func.func @_ffn_kernel(%arg0: i32, %arg1: i32, %arg2: memref<32x128xbf16, #tpu.memory_space<vmem>>, %arg3: memref<128x256xbf16, #tpu.memory_space<vmem>>, %arg4: memref<1x256xf32, #tpu.memory_space<vmem>>, %arg5: memref<256x128xbf16, #tpu.memory_space<vmem>>, %arg6: memref<1x128xf32, #tpu.memory_space<vmem>>, %arg7: memref<32x128xf32, #tpu.memory_space<vmem>>, %arg8: memref<32x128xf32, #tpu.memory_space<vmem>>) attributes {dimension_semantics = [#tpu.dimension_semantics<parallel>, #tpu.dimension_semantics<arbitrary>], iteration_bounds = array<i64: 1, 1>, scalar_prefetch = 0 : i64, scratch_operands = 1 : i64, tpu.core_type = #tpu.core_type<tc>, window_params = [{transform_indices = @transform_0, window_bounds = array<i64: 32, 128>}, {transform_indices = @transform_1, window_bounds = array<i64: 128, 256>}, {transform_indices = @transform_2, window_bounds = array<i64: 1, 256>}, {transform_indices = @transform_3, window_bounds = array<i64: 256, 128>}, {pipeline_mode = #tpu.pipeline_mode<synchronous>, transform_indices = @transform_4, window_bounds = array<i64: 1, 128>}, {transform_indices = @transform_5, window_bounds = array<i64: 32, 128>}]} {
    %c0_i32 = arith.constant 0 : i32
    %0 = arith.cmpi eq, %arg1, %c0_i32 : i32
    %1 = arith.extui %0 : i1 to i32
    %c0_i32_0 = arith.constant 0 : i32
    %2 = arith.cmpi ne, %1, %c0_i32_0 : i32
    scf.if %2 {
      %cst_16 = arith.constant 0.000000e+00 : f32
      %20 = vector.broadcast %cst_16 : f32 to vector<32x128xf32>
      %c0_17 = arith.constant 0 : index
      %c0_18 = arith.constant 0 : index
      %21 = vector.load %arg8[%c0_17, %c0_18] : memref<32x128xf32, #tpu.memory_space<vmem>>, vector<32x128xf32>
      tpu.vector_store %arg8[%c0_17, %c0_18], %20 {strides = array<i32>} : memref<32x128xf32, #tpu.memory_space<vmem>>, vector<32x128xf32>,
    } else {
    }
    %c0 = arith.constant 0 : index
    %c0_1 = arith.constant 0 : index
    %3 = vector.load %arg2[%c0, %c0_1] : memref<32x128xbf16, #tpu.memory_space<vmem>>, vector<32x128xbf16>
    %c0_2 = arith.constant 0 : index
    %c0_3 = arith.constant 0 : index
    %4 = vector.load %arg3[%c0_2, %c0_3] : memref<128x256xbf16, #tpu.memory_space<vmem>>, vector<128x256xbf16>
    %cst = arith.constant dense<0.000000e+00> : vector<32x256xf32>
    %5 = tpu.matmul %3, %4, %cst {dimension_numbers = #tpu.dot_dimension_numbers<[1], [0], [0], [1], [0, 0, 1, 1], [], []>} : vector<32x128xbf16>, vector<128x256xbf16>, vector<32x256xf32> -> vector<32x256xf32>
    %c0_4 = arith.constant 0 : index
    %c0_5 = arith.constant 0 : index
    %6 = vector.load %arg4[%c0_4, %c0_5] : memref<1x256xf32, #tpu.memory_space<vmem>>, vector<1x256xf32>
    %7 = vector.broadcast %6 : vector<1x256xf32> to vector<32x256xf32>
    %8 = arith.addf %5, %7 : vector<32x256xf32>
    %cst_6 = arith.constant 0.000000e+00 : f32
    %9 = vector.broadcast %cst_6 : f32 to vector<32x256xf32>
    %10 = arith.maximumf %8, %9 : vector<32x256xf32>
    %c0_7 = arith.constant 0 : index
    %c0_8 = arith.constant 0 : index
    %11 = vector.load %arg8[%c0_7, %c0_8] : memref<32x128xf32, #tpu.memory_space<vmem>>, vector<32x128xf32>
    %12 = arith.truncf %10 : vector<32x256xf32> to vector<32x256xbf16>
    %c0_9 = arith.constant 0 : index
    %c0_10 = arith.constant 0 : index
    %13 = vector.load %arg5[%c0_9, %c0_10] : memref<256x128xbf16, #tpu.memory_space<vmem>>, vector<256x128xbf16>
    %cst_11 = arith.constant dense<0.000000e+00> : vector<32x128xf32>
    %14 = tpu.matmul %12, %13, %cst_11 {dimension_numbers = #tpu.dot_dimension_numbers<[1], [0], [0], [1], [0, 0, 1, 1], [], []>} : vector<32x256xbf16>, vector<256x128xbf16>, vector<32x128xf32> -> vector<32x128xf32>
    %15 = arith.addf %11, %14 : vector<32x128xf32>
    %c0_12 = arith.constant 0 : index
    %c0_13 = arith.constant 0 : index
    %16 = vector.load %arg8[%c0_12, %c0_13] : memref<32x128xf32, #tpu.memory_space<vmem>>, vector<32x128xf32>
    tpu.vector_store %arg8[%c0_12, %c0_13], %15 {strides = array<i32>} : memref<32x128xf32, #tpu.memory_space<vmem>>, vector<32x128xf32>,
    %c0_i32_14 = arith.constant 0 : i32
    %17 = arith.cmpi eq, %arg1, %c0_i32_14 : i32
    %18 = arith.extui %17 : i1 to i32
    %c0_i32_15 = arith.constant 0 : i32
    %19 = arith.cmpi ne, %18, %c0_i32_15 : i32
    scf.if %19 {
      %c0_16 = arith.constant 0 : index
      %c0_17 = arith.constant 0 : index
      %20 = vector.load %arg8[%c0_16, %c0_17] : memref<32x128xf32, #tpu.memory_space<vmem>>, vector<32x128xf32>
      %c0_18 = arith.constant 0 : index
      %c0_19 = arith.constant 0 : index
      %21 = vector.load %arg6[%c0_18, %c0_19] : memref<1x128xf32, #tpu.memory_space<vmem>>, vector<1x128xf32>
      %22 = vector.broadcast %21 : vector<1x128xf32> to vector<32x128xf32>
      %23 = arith.addf %20, %22 : vector<32x128xf32>
      %c0_20 = arith.constant 0 : index
      %c0_21 = arith.constant 0 : index
      %24 = vector.load %arg7[%c0_20, %c0_21] : memref<32x128xf32, #tpu.memory_space<vmem>>, vector<32x128xf32>
      tpu.vector_store %arg7[%c0_20, %c0_21], %23 {strides = array<i32>} : memref<32x128xf32, #tpu.memory_space<vmem>>, vector<32x128xf32>,
    } else {
    }
    return
  }
  func.func @transform_0(%arg0: i32, %arg1: i32) -> (i32, i32) {
    %c0_i32 = arith.constant 0 : i32
    %c0_i32_0 = arith.constant 0 : i32
    return %arg0, %c0_i32 : i32, i32
  }
  func.func @transform_1(%arg0: i32, %arg1: i32) -> (i32, i32) {
    %c0_i32 = arith.constant 0 : i32
    %c0_i32_0 = arith.constant 0 : i32
    return %c0_i32, %arg1 : i32, i32
  }
  func.func @transform_2(%arg0: i32, %arg1: i32) -> (i32, i32) {
    %c0_i32 = arith.constant 0 : i32
    %c0_i32_0 = arith.constant 0 : i32
    return %c0_i32, %arg1 : i32, i32
  }
  func.func @transform_3(%arg0: i32, %arg1: i32) -> (i32, i32) {
    %c0_i32 = arith.constant 0 : i32
    %c0_i32_0 = arith.constant 0 : i32
    return %arg1, %c0_i32 : i32, i32
  }
  func.func @transform_4(%arg0: i32, %arg1: i32) -> (i32, i32) {
    %c0_i32 = arith.constant 0 : i32
    %c0_i32_0 = arith.constant 0 : i32
    %c0_i32_1 = arith.constant 0 : i32
    return %c0_i32, %c0_i32_0 : i32, i32
  }
  func.func @transform_5(%arg0: i32, %arg1: i32) -> (i32, i32) {
    %c0_i32 = arith.constant 0 : i32
    %c0_i32_0 = arith.constant 0 : i32
    return %arg0, %c0_i32 : i32, i32
  }
}

</mosaic_0001>

<llo_original>
// kernel: positionwise_feed_forward.1
$region0: #{positionwise_feed_forward.1}
  #allocation0 [shape = 'u32[]', space=smem, size = 0x4, offset = 0x4, fixed_abs, tag = 'smem constant byte address 0x4 - core index']
  #allocation1 [shape = 'u32[144,128]{1,0:T(1,128)}', space=vmem, size = 0x12000, scoped, tag = 'internal scratch']
  #allocation2 [shape = 'f32[32,128]{1,0:T(8,128)}', space=vmem, size = 0x4000, scoped, tag = 'scratch operand']
  %s0 = inlined_call_operand.vmem [shape: bf16[32,128], index: 0, kind: input, shape index: {}]
  %s1 = inlined_call_operand.vmem [shape: bf16[128,256], index: 1, kind: input, shape index: {}]
  %s2 = inlined_call_operand.vmem [shape: f32[1,256], index: 2, kind: input, shape index: {}]
  %s3 = inlined_call_operand.vmem [shape: bf16[256,128], index: 3, kind: input, shape index: {}]
  %s4 = inlined_call_operand.vmem [shape: f32[1,128], index: 4, kind: input, shape index: {}]
  %s5 = inlined_call_operand.hbm [shape: f32[32,128], index: 5, kind: output, shape index: {}]
  %s6 = sld [smem:[#allocation0]]
  $region38: #{positionwise_feed_forward.1} parent=0
    _
  %s8 = ssub.s32 1, %s6
  %s9 = scalar_select 0, %s8, %s6
  $region1: #{positionwise_feed_forward.1} parent=0
    #allocation3 [shape = 'u8[16384]{0}', space=vmem, size = 0x4000, scoped, tag = 'output window, operand 0, single buffered']
    #allocation4 [shape = 's32[1]{0}', space=sflag, size = 0x4, scoped, tag = 'scoped memory for positionwise_feed_forward.1']
    %10 = vsyncpa [#allocation4], 0
    // Predicated region
    $region2: #{positionwise_feed_forward.1} parent=1 // pred_check
      _
    $region3: #{positionwise_feed_forward.1} parent=1 // pred_check_branch
      %12 = sbr.rel (0) target = $region5
    $region4: #{positionwise_feed_forward.1} parent=1 // pred_region
      _
    $region5: #{positionwise_feed_forward.1} parent=1 // pred_fallthru
      _
    // Predicated region
    $region6: #{positionwise_feed_forward.1} parent=1 // pred_check
      _
    $region7: #{positionwise_feed_forward.1} parent=1 // pred_check_branch
      %14 = sbr.rel (0) target = $region9
    $region8: #{positionwise_feed_forward.1} parent=1 // pred_region
      _
    $region9: #{positionwise_feed_forward.1} parent=1 // pred_fallthru
      _
    // Predicated region
    $region10: #{positionwise_feed_forward.1} parent=1 // pred_check
      _
    $region11: #{positionwise_feed_forward.1} parent=1 // pred_check_branch
      %16 = sbr.rel (0) target = $region13
    $region12: #{positionwise_feed_forward.1} parent=1 // pred_region
      _
    $region13: #{positionwise_feed_forward.1} parent=1 // pred_fallthru
      _
    // Predicated region
    $region14: #{positionwise_feed_forward.1} parent=1 // pred_check
      _
    $region15: #{positionwise_feed_forward.1} parent=1 // pred_check_branch
      %18 = sbr.rel (0) target = $region17
    $region16: #{positionwise_feed_forward.1} parent=1 // pred_region
      _
    $region17: #{positionwise_feed_forward.1} parent=1 // pred_fallthru
      _
    // Predicated region
    $region18: #{positionwise_feed_forward.1} parent=1 // pred_check
      _
    $region19: #{positionwise_feed_forward.1} parent=1 // pred_check_branch
      %20 = sbr.rel (0) target = $region21
    $region20: #{positionwise_feed_forward.1} parent=1 // pred_region
      _
    $region21: #{positionwise_feed_forward.1} parent=1 // pred_fallthru
      _
    %p22 = scmp.eq.s32.totalorder 0, 0
    // Predicated region
    $region22: #{positionwise_feed_forward.1} parent=1 // pred_check
      %p23 = pneg %p22
    $region23: #{positionwise_feed_forward.1} parent=1 // pred_check_branch
      %25 = sbr.rel (%p23) target = $region25
    $region24: #{positionwise_feed_forward.1} parent=1 // pred_region
      %26 = vst [vmem:[#allocation2] sm:$0xff] 0.0
      %27 = vst [vmem:[#allocation2 + $0x8] sm:$0xff] 0.0
      %28 = vst [vmem:[#allocation2 + $0x10] sm:$0xff] 0.0
      %29 = vst [vmem:[#allocation2 + $0x18] sm:$0xff] 0.0
    $region25: #{positionwise_feed_forward.1} parent=1 // pred_fallthru
      _
    %v30 = vld [vmem:[%s0] sm:$0xf]
    %v31 = vld [vmem:[%s0 + $0x4] sm:$0xf]
    %v32 = vld [vmem:[%s0 + $0x8] sm:$0xf]
    %v33 = vld [vmem:[%s0 + $0xc] sm:$0xf]
    %v34 = vld [vmem:[%s1] sm:$0xff]
    %v35 = vld [vmem:[%s1 + $0x8] sm:$0xff]
    %v36 = vld [vmem:[%s1 + $0x10] sm:$0xff]
    %v37 = vld [vmem:[%s1 + $0x18] sm:$0xff]
    %v38 = vld [vmem:[%s1 + $0x20] sm:$0xff]
    %v39 = vld [vmem:[%s1 + $0x28] sm:$0xff]
    %v40 = vld [vmem:[%s1 + $0x30] sm:$0xff]
    %v41 = vld [vmem:[%s1 + $0x38] sm:$0xff]
    %v42 = vld [vmem:[%s1 + $0x40] sm:$0xff]
    %v43 = vld [vmem:[%s1 + $0x48] sm:$0xff]
    %v44 = vld [vmem:[%s1 + $0x50] sm:$0xff]
    %v45 = vld [vmem:[%s1 + $0x58] sm:$0xff]
    %v46 = vld [vmem:[%s1 + $0x60] sm:$0xff]
    %v47 = vld [vmem:[%s1 + $0x68] sm:$0xff]
    %v48 = vld [vmem:[%s1 + $0x70] sm:$0xff]
    %v49 = vld [vmem:[%s1 + $0x78] sm:$0xff]
    %v50 = vld [vmem:[%s2] sm:$0x3]
    %v52 = vlaneseq
    %v53 = vshrl.u32 %v52, 7
    %v54 = vsub.s32 0, %v53
    %v55 = vrot.slane %v50, %v54
    %v56 = vlaneseq
    %v57 = vshrl.u32 %v56, 7
    %v58 = vsub.s32 1, %v57
    %v59 = vrot.slane %v50, %v58
    %v66 = vunpack.c.l.b16 %v30
    %v67 = vunpack.c.l.b16 %v31
    %v68 = vunpack.c.l.b16 %v32
    %v69 = vunpack.c.l.b16 %v33
    %v70 = vpack.c.b16 %v67, %v66
    %v71 = vpack.c.b16 %v69, %v68
    %v90 = vunpack.c.l.b16 %v34
    %v91 = vunpack.c.h.b16 %v34
    %v92 = vunpack.c.l.b16 %v35
    %v93 = vunpack.c.h.b16 %v35
    %v94 = vunpack.c.l.b16 %v36
    %v95 = vunpack.c.h.b16 %v36
    %v96 = vunpack.c.l.b16 %v37
    %v97 = vunpack.c.h.b16 %v37
    %v98 = vunpack.c.l.b16 %v38
    %v99 = vunpack.c.h.b16 %v38
    %v100 = vunpack.c.l.b16 %v39
    %v101 = vunpack.c.h.b16 %v39
    %v102 = vunpack.c.l.b16 %v40
    %v103 = vunpack.c.h.b16 %v40
    %v104 = vunpack.c.l.b16 %v41
    %v105 = vunpack.c.h.b16 %v41
    %v106 = vunpack.c.l.b16 %v42
    %v107 = vunpack.c.h.b16 %v42
    %v108 = vunpack.c.l.b16 %v43
    %v109 = vunpack.c.h.b16 %v43
    %v110 = vunpack.c.l.b16 %v44
    %v111 = vunpack.c.h.b16 %v44
    %v112 = vunpack.c.l.b16 %v45
    %v113 = vunpack.c.h.b16 %v45
    %v114 = vunpack.c.l.b16 %v46
    %v115 = vunpack.c.h.b16 %v46
    %v116 = vunpack.c.l.b16 %v47
    %v117 = vunpack.c.h.b16 %v47
    %v118 = vunpack.c.l.b16 %v48
    %v119 = vunpack.c.h.b16 %v48
    %v120 = vunpack.c.l.b16 %v49
    %v121 = vunpack.c.h.b16 %v49
    %v122 = vpack.c.b16 %v92, %v90
    %v123 = vpack.c.b16 %v93, %v91
    %v124 = vpack.c.b16 %v96, %v94
    %v125 = vpack.c.b16 %v97, %v95
    %v126 = vpack.c.b16 %v100, %v98
    %v127 = vpack.c.b16 %v101, %v99
    %v128 = vpack.c.b16 %v104, %v102
    %v129 = vpack.c.b16 %v105, %v103
    %v130 = vpack.c.b16 %v108, %v106
    %v131 = vpack.c.b16 %v109, %v107
    %v132 = vpack.c.b16 %v112, %v110
    %v133 = vpack.c.b16 %v113, %v111
    %v134 = vpack.c.b16 %v116, %v114
    %v135 = vpack.c.b16 %v117, %v115
    %v136 = vpack.c.b16 %v120, %v118
    %v137 = vpack.c.b16 %v121, %v119
    %154 = vmatprep.subr.bf16.mxu0 %v137
    %155 = vmatpush1.bf16.msra.mxu0 %v136
    %156 = vmatprep.subr.bf16.mxu0 %v135
    %157 = vmatpush1.bf16.msra.mxu0 %v134
    %158 = vmatprep.subr.bf16.mxu0 %v133
    %159 = vmatpush1.bf16.msra.mxu0 %v132
    %160 = vmatprep.subr.bf16.mxu0 %v131
    %161 = vmatpush1.bf16.msra.mxu0 %v130
    %162 = vmatprep.subr.bf16.mxu0 %v129
    %163 = vmatpush1.bf16.msra.mxu0 %v128
    %164 = vmatprep.subr.bf16.mxu0 %v127
    %165 = vmatpush1.bf16.msra.mxu0 %v126
    %166 = vmatprep.subr.bf16.mxu0 %v125
    %167 = vmatpush1.bf16.msra.mxu0 %v124
    %168 = vmatprep.subr.bf16.mxu0 %v123
    %169 = vmatpush1.bf16.msra.mxu0 %v122
    %170 = vmatprep.subr.bf16.mxu0 0
    %171 = vmatpush2.bf16.msra.mxu0 0
    %172 = vmatprep.subr.bf16.mxu0 0
    %173 = vmatpush2.bf16.msra.mxu0 0
    %174 = vmatprep.subr.bf16.mxu0 0
    %175 = vmatpush2.bf16.msra.mxu0 0
    %176 = vmatprep.subr.bf16.mxu0 0
    %177 = vmatpush2.bf16.msra.mxu0 0
    %178 = vmatprep.subr.bf16.mxu0 0
    %179 = vmatpush2.bf16.msra.mxu0 0
    %180 = vmatprep.subr.bf16.mxu0 0
    %181 = vmatpush2.bf16.msra.mxu0 0
    %182 = vmatprep.subr.bf16.mxu0 0
    %183 = vmatpush2.bf16.msra.mxu0 0
    %184 = vmatprep.subr.bf16.mxu0 0
    %185 = vmatpush2.bf16.msra.mxu0 0
    %186 = vmatprep.mubr.bf16.mxu0 0
    %187 = vmatmul.mubr.bf16.gmra.mxu0 %v70
    %v188 = vpop.f32.mrf.mxu0
    %v189 = vadd.f32 %v55, %v188
    %v190 = vpop.f32.mrf.mxu0
    %v191 = vadd.f32 %v59, %v190
    %v192 = vpop.f32.mrf.mxu0
    %v193 = vadd.f32 %v55, %v192
    %v194 = vpop.f32.mrf.mxu0
    %v195 = vadd.f32 %v59, %v194
    %196 = vmatprep.mubr.bf16.mxu0 0
    %197 = vmatmul.mubr.bf16.gmra.mxu0 %v71
    %v198 = vpop.f32.mrf.mxu0
    %v199 = vadd.f32 %v55, %v198
    %v200 = vpop.f32.mrf.mxu0
    %v201 = vadd.f32 %v59, %v200
    %v202 = vpop.f32.mrf.mxu0
    %v203 = vadd.f32 %v55, %v202
    %v204 = vpop.f32.mrf.mxu0
    %v205 = vadd.f32 %v59, %v204
    %206 = vdwg.mxu0
    %v207 = vmax.f32 %v189, 0.0
    %v208 = vmax.f32 %v191, 0.0
    %v209 = vmax.f32 %v193, 0.0
    %v210 = vmax.f32 %v195, 0.0
    %v211 = vmax.f32 %v199, 0.0
    %v212 = vmax.f32 %v201, 0.0
    %v213 = vmax.f32 %v203, 0.0
    %v214 = vmax.f32 %v205, 0.0
    %v215 = vld [vmem:[#allocation2] sm:$0xff]
    %v216 = vld [vmem:[#allocation2 + $0x8] sm:$0xff]
    %v217 = vld [vmem:[#allocation2 + $0x10] sm:$0xff]
    %v218 = vld [vmem:[#allocation2 + $0x18] sm:$0xff]
    %v219 = vpack.c.bf16 %v209, %v207
    %v220 = vpack.c.bf16 %v210, %v208
    %v221 = vpack.c.bf16 %v213, %v211
    %v222 = vpack.c.bf16 %v214, %v212
    %v223 = vld [vmem:[%s3] sm:$0xf]
    %v224 = vld [vmem:[%s3 + $0x4] sm:$0xf]
    %v225 = vld [vmem:[%s3 + $0x8] sm:$0xf]
    %v226 = vld [vmem:[%s3 + $0xc] sm:$0xf]
    %v227 = vld [vmem:[%s3 + $0x10] sm:$0xf]
    %v228 = vld [vmem:[%s3 + $0x14] sm:$0xf]
    %v229 = vld [vmem:[%s3 + $0x18] sm:$0xf]
    %v230 = vld [vmem:[%s3 + $0x1c] sm:$0xf]
    %v231 = vld [vmem:[%s3 + $0x20] sm:$0xf]
    %v232 = vld [vmem:[%s3 + $0x24] sm:$0xf]
    %v233 = vld [vmem:[%s3 + $0x28] sm:$0xf]
    %v234 = vld [vmem:[%s3 + $0x2c] sm:$0xf]
    %v235 = vld [vmem:[%s3 + $0x30] sm:$0xf]
    %v236 = vld [vmem:[%s3 + $0x34] sm:$0xf]
    %v237 = vld [vmem:[%s3 + $0x38] sm:$0xf]
    %v238 = vld [vmem:[%s3 + $0x3c] sm:$0xf]
    %v239 = vld [vmem:[%s3 + $0x40] sm:$0xf]
    %v240 = vld [vmem:[%s3 + $0x44] sm:$0xf]
    %v241 = vld [vmem:[%s3 + $0x48] sm:$0xf]
    %v242 = vld [vmem:[%s3 + $0x4c] sm:$0xf]
    %v243 = vld [vmem:[%s3 + $0x50] sm:$0xf]
    %v244 = vld [vmem:[%s3 + $0x54] sm:$0xf]
    %v245 = vld [vmem:[%s3 + $0x58] sm:$0xf]
    %v246 = vld [vmem:[%s3 + $0x5c] sm:$0xf]
    %v247 = vld [vmem:[%s3 + $0x60] sm:$0xf]
    %v248 = vld [vmem:[%s3 + $0x64] sm:$0xf]
    %v249 = vld [vmem:[%s3 + $0x68] sm:$0xf]
    %v250 = vld [vmem:[%s3 + $0x6c] sm:$0xf]
    %v251 = vld [vmem:[%s3 + $0x70] sm:$0xf]
    %v252 = vld [vmem:[%s3 + $0x74] sm:$0xf]
    %v253 = vld [vmem:[%s3 + $0x78] sm:$0xf]
    %v254 = vld [vmem:[%s3 + $0x7c] sm:$0xf]
    %v287 = vunpack.c.l.b16 %v223
    %v288 = vunpack.c.l.b16 %v224
    %v289 = vunpack.c.l.b16 %v225
    %v290 = vunpack.c.l.b16 %v226
    %v291 = vunpack.c.l.b16 %v227
    %v292 = vunpack.c.l.b16 %v228
    %v293 = vunpack.c.l.b16 %v229
    %v294 = vunpack.c.l.b16 %v230
    %v295 = vunpack.c.l.b16 %v231
    %v296 = vunpack.c.l.b16 %v232
    %v297 = vunpack.c.l.b16 %v233
    %v298 = vunpack.c.l.b16 %v234
    %v299 = vunpack.c.l.b16 %v235
    %v300 = vunpack.c.l.b16 %v236
    %v301 = vunpack.c.l.b16 %v237
    %v302 = vunpack.c.l.b16 %v238
    %v303 = vunpack.c.l.b16 %v239
    %v304 = vunpack.c.l.b16 %v240
    %v305 = vunpack.c.l.b16 %v241
    %v306 = vunpack.c.l.b16 %v242
    %v307 = vunpack.c.l.b16 %v243
    %v308 = vunpack.c.l.b16 %v244
    %v309 = vunpack.c.l.b16 %v245
    %v310 = vunpack.c.l.b16 %v246
    %v311 = vunpack.c.l.b16 %v247
    %v312 = vunpack.c.l.b16 %v248
    %v313 = vunpack.c.l.b16 %v249
    %v314 = vunpack.c.l.b16 %v250
    %v315 = vunpack.c.l.b16 %v251
    %v316 = vunpack.c.l.b16 %v252
    %v317 = vunpack.c.l.b16 %v253
    %v318 = vunpack.c.l.b16 %v254
    %v319 = vpack.c.b16 %v288, %v287
    %v320 = vpack.c.b16 %v290, %v289
    %v321 = vpack.c.b16 %v292, %v291
    %v322 = vpack.c.b16 %v294, %v293
    %v323 = vpack.c.b16 %v296, %v295
    %v324 = vpack.c.b16 %v298, %v297
    %v325 = vpack.c.b16 %v300, %v299
    %v326 = vpack.c.b16 %v302, %v301
    %v327 = vpack.c.b16 %v304, %v303
    %v328 = vpack.c.b16 %v306, %v305
    %v329 = vpack.c.b16 %v308, %v307
    %v330 = vpack.c.b16 %v310, %v309
    %v331 = vpack.c.b16 %v312, %v311
    %v332 = vpack.c.b16 %v314, %v313
    %v333 = vpack.c.b16 %v316, %v315
    %v334 = vpack.c.b16 %v318, %v317
    %351 = vmatprep.subr.bf16.mxu0 0
    %352 = vmatpush1.bf16.msra.mxu0 %v326
    %353 = vmatprep.subr.bf16.mxu0 0
    %354 = vmatpush1.bf16.msra.mxu0 %v325
    %355 = vmatprep.subr.bf16.mxu0 0
    %356 = vmatpush1.bf16.msra.mxu0 %v324
    %357 = vmatprep.subr.bf16.mxu0 0
    %358 = vmatpush1.bf16.msra.mxu0 %v323
    %359 = vmatprep.subr.bf16.mxu0 0
    %360 = vmatpush1.bf16.msra.mxu0 %v322
    %361 = vmatprep.subr.bf16.mxu0 0
    %362 = vmatpush1.bf16.msra.mxu0 %v321
    %363 = vmatprep.subr.bf16.mxu0 0
    %364 = vmatpush1.bf16.msra.mxu0 %v320
    %365 = vmatprep.subr.bf16.mxu0 0
    %366 = vmatpush1.bf16.msra.mxu0 %v319
    %367 = vmatprep.subr.bf16.mxu0 0
    %368 = vmatpush2.bf16.msra.mxu0 %v334
    %369 = vmatprep.subr.bf16.mxu0 0
    %370 = vmatpush2.bf16.msra.mxu0 %v333
    %371 = vmatprep.subr.bf16.mxu0 0
    %372 = vmatpush2.bf16.msra.mxu0 %v332
    %373 = vmatprep.subr.bf16.mxu0 0
    %374 = vmatpush2.bf16.msra.mxu0 %v331
    %375 = vmatprep.subr.bf16.mxu0 0
    %376 = vmatpush2.bf16.msra.mxu0 %v330
    %377 = vmatprep.subr.bf16.mxu0 0
    %378 = vmatpush2.bf16.msra.mxu0 %v329
    %379 = vmatprep.subr.bf16.mxu0 0
    %380 = vmatpush2.bf16.msra.mxu0 %v328
    %381 = vmatprep.subr.bf16.mxu0 0
    %382 = vmatpush2.bf16.msra.mxu0 %v327
    %383 = vmatprep.mubr.bf16.mxu0 %v220
    %384 = vmatmul.mubr.bf16.gmra.mxu0 %v219
    %v385 = vpop.f32.mrf.mxu0
    %v386 = vadd.f32 0.0, %v385
    %v387 = vpop.f32.mrf.mxu0
    %v388 = vpop.f32.mrf.mxu0
    %v389 = vadd.f32 0.0, %v388
    %v390 = vpop.f32.mrf.mxu0
    %391 = vmatprep.mubr.bf16.mxu0 %v222
    %392 = vmatmul.mubr.bf16.gmra.mxu0 %v221
    %v393 = vpop.f32.mrf.mxu0
    %v394 = vadd.f32 0.0, %v393
    %v395 = vpop.f32.mrf.mxu0
    %v396 = vpop.f32.mrf.mxu0
    %v397 = vadd.f32 0.0, %v396
    %v398 = vpop.f32.mrf.mxu0
    %399 = vdwg.mxu0
    %v400 = vadd.f32 %v215, %v386
    %v401 = vadd.f32 %v216, %v389
    %v402 = vadd.f32 %v217, %v394
    %v403 = vadd.f32 %v218, %v397
    %404 = vst [vmem:[#allocation2] sm:$0xff] %v400
    %405 = vst [vmem:[#allocation2 + $0x8] sm:$0xff] %v401
    %406 = vst [vmem:[#allocation2 + $0x10] sm:$0xff] %v402
    %407 = vst [vmem:[#allocation2 + $0x18] sm:$0xff] %v403
    // Predicated region
    $region26: #{positionwise_feed_forward.1} parent=1 // pred_check
      %p408 = pneg %p22
    $region27: #{positionwise_feed_forward.1} parent=1 // pred_check_branch
      %410 = sbr.rel (%p408) target = $region29
    $region28: #{positionwise_feed_forward.1} parent=1 // pred_region
      %v411 = vld [vmem:[#allocation2] sm:$0xff]
      %v412 = vld [vmem:[#allocation2 + $0x8] sm:$0xff]
      %v413 = vld [vmem:[#allocation2 + $0x10] sm:$0xff]
      %v414 = vld [vmem:[#allocation2 + $0x18] sm:$0xff]
      %v415 = vld [vmem:[%s4] sm:$0x1]
      %v417 = vlaneseq
      %v418 = vshrl.u32 %v417, 7
      %v419 = vsub.s32 0, %v418
      %v420 = vrot.slane %v415, %v419
      %v422 = vadd.f32 %v411, %v420
      %v423 = vadd.f32 %v412, %v420
      %v424 = vadd.f32 %v413, %v420
      %v425 = vadd.f32 %v414, %v420
      %426 = vst [vmem:[#allocation3] sm:$0xff] %v422
      %427 = vst [vmem:[#allocation3 + $0x8] sm:$0xff] %v423
      %428 = vst [vmem:[#allocation3 + $0x10] sm:$0xff] %v424
      %429 = vst [vmem:[#allocation3 + $0x18] sm:$0xff] %v425
    $region29: #{positionwise_feed_forward.1} parent=1 // pred_fallthru
      _
    // Predicated region
    $region30: #{positionwise_feed_forward.1} parent=1 // pred_check
      _
    $region31: #{positionwise_feed_forward.1} parent=1 // pred_check_branch
      %431 = sbr.rel (0) target = $region33
    $region32: #{positionwise_feed_forward.1} parent=1 // pred_region
      %s433 = ssub.s32 512, 512
      %434 = vsyncadd [#allocation4], %s433
      %s435 = sshll.u32 [#allocation3], 4
      %s436 = int_to_ptr.vmem [resolvable:$true] %s435
      %441 = dma.vmem_to_hbm [thread:$0]  %s436, 512, %s5, [#allocation4], 128, 128, 8
    $region33: #{positionwise_feed_forward.1} parent=1 // pred_fallthru
      _
    // Predicated region
    $region34: #{positionwise_feed_forward.1} parent=1 // pred_check
      _
    $region35: #{positionwise_feed_forward.1} parent=1 // pred_check_branch
      %443 = sbr.rel (0) target = $region37
    $region36: #{positionwise_feed_forward.1} parent=1 // pred_region
      %444 = dma.done [#allocation4], 512
    $region37: #{positionwise_feed_forward.1} parent=1 // pred_fallthru
      _
    %445 = vsyncpa [#allocation4], 1

</llo_original>
